<compile_context>
chip_gen: v7x
topology: tpu7x:2x2x1
jax: 0.10.0
libtpu: 0.0.40
codegen_flags: <defaults>
</compile_context>

<pallas_src>
import functools
import math

import jax
import jax.numpy as jnp
from jax import lax
from jax.experimental import pallas as pl
from jax.experimental.pallas import tpu as pltpu


def _self_attention_kernel(x_ref, wqkv_ref, bqkv_ref, o_ref, *, bt, s, hp,
                           exp_dtype, chunk_qkv):
    rows = bt * s
    x2 = x_ref[...].reshape(rows, hp)                        # (Bt*S, Hp) bf16

    if chunk_qkv:
        # Large-H path: three MXU dots against column chunks of the fused
        # weight so only one (rows, Hp) f32 projection slab is live at a time
        # (peak-VMEM reduction, matters under v7x's 64 MiB VMEM).
        def proj(c):
            w = wqkv_ref[:, c * hp:(c + 1) * hp]             # (Hp, Hp) bf16
            b = bqkv_ref[:, c * hp:(c + 1) * hp]             # (1, Hp) f32
            y = jnp.dot(x2, w, preferred_element_type=jnp.float32) + b
            return y.astype(jnp.bfloat16).reshape(bt, s, hp)
        q, k, v = proj(0), proj(1), proj(2)
    else:
        # Fused QKV projection: one MXU matmul (bf16 in, f32 accumulate) and a
        # single broadcast bias add. The 1/sqrt(H) scale is already folded into
        # the Q columns of the fused weight/bias in the wrapper.
        qkv = jnp.dot(x2, wqkv_ref[...],
                      preferred_element_type=jnp.float32) + bqkv_ref[...]
        q = qkv[:, :hp].astype(jnp.bfloat16).reshape(bt, s, hp)
        k = qkv[:, hp:2 * hp].astype(jnp.bfloat16).reshape(bt, s, hp)
        v = qkv[:, 2 * hp:].astype(jnp.bfloat16).reshape(bt, s, hp)

    # scores[b] = q[b] @ k[b]^T, expressed directly as a contraction over the
    # hidden axis (no transpose materialized).
    scores = lax.dot_general(
        q, k,
        dimension_numbers=(((2,), (2,)), ((0,), (0,))),
        preferred_element_type=jnp.float32)                  # (Bt, S, S) f32

    # Numerically-stable softmax with normalization deferred past the AV
    # matmul: no per-element multiply over the (Bt,S,S) tile.
    m = jnp.max(scores, axis=-1, keepdims=True)
    e = jnp.exp((scores - m).astype(exp_dtype))              # bf16 EUP on v6e/v7x
    denom = jnp.sum(e, axis=-1, keepdims=True, dtype=jnp.float32)  # (Bt,S,1)

    # unnormalized_output[b] = e[b] @ v[b]
    out = lax.dot_general(
        e.astype(jnp.bfloat16), v,
        dimension_numbers=(((2,), (1,)), ((0,), (0,))),
        preferred_element_type=jnp.float32)                  # (Bt, S, Hp) f32
    out = out * pl.reciprocal(denom, approx=True)            # deferred normalize
    o_ref[...] = out.astype(o_ref.dtype)


def _pick_tiling(B, S, Hp, *, vmem_cap, out_itemsize, exp_bytes, min_steps):
    """Largest batch tile (divisor of B) whose working set fits the device
    VMEM budget; also decides whether to chunk the QKV projection."""
    budget = max(vmem_cap - (8 << 20), 8 << 20)
    rows_cap = 2048 if vmem_cap >= (100 << 20) else 1024     # v5e/v6e vs v7x

    def estimate(bt, chunk):
        rows = bt * S
        const = Hp * 3 * Hp * 2 + 3 * Hp * 4                 # W/b, single-buffered
        per_row = (2 * Hp * 2                                 # x block (bf16), 2 bufs
                   + 2 * Hp * out_itemsize                    # out block, 2 bufs
                   + (Hp if chunk else 3 * Hp) * 4            # live f32 projection
                   + 3 * Hp * 2                               # q/k/v bf16
                   + Hp * 4)                                  # f32 AV accumulator
        score = rows * S * (4 + exp_bytes + 2)                # scores f32 + e + bf16 e
        return const + rows * per_row + score

    max_bt = max(1, B // min_steps)
    bt_best = 1
    chunk_best = S * 3 * Hp * 4 > (4 << 20)
    est_best = estimate(bt_best, chunk_best)
    for d in range(1, B + 1):
        if B % d or d > max_bt or d * S > rows_cap:
            continue
        chunk = d * S * 3 * Hp * 4 > (4 << 20)
        est = estimate(d, chunk)
        if est <= budget and d >= bt_best:
            bt_best, chunk_best, est_best = d, chunk, est
    return bt_best, chunk_best, est_best


def self_attention(x, wq, bq, wk, bk, wv, bv):
    """x: [B, S, H]. Weights in PyTorch nn.Linear layout: w [H_out, H_in], b [H_out]."""
    B, S, H = x.shape
    scale = math.sqrt(H)
    out_dtype = x.dtype

    # Pad hidden dim to a lane-dense multiple of 128. Zero padding is exact:
    # padded input columns hit zero weight rows, padded q/k columns contribute
    # zero to the scores, and padded output columns are sliced off below.
    Hp = ((H + 127) // 128) * 128

    # --- Generation-aware sizing -------------------------------------------
    try:
        vmem_cap = int(pltpu.get_tpu_info().vmem_capacity_bytes)
    except Exception:
        vmem_cap = 64 << 20                    # conservative (v7x-sized) fallback
    try:
        kind = jax.devices()[0].device_kind.lower()
    except Exception:
        kind = ""
    is_v5 = "v5" in kind
    is_v7 = ("v7" in kind) or ("7x" in kind)

    # bf16 exp on v6e/v7x (bf16 EUP; args <= 0 after the max-subtract), f32 on v5e.
    exp_dtype = jnp.float32 if is_v5 else jnp.bfloat16

    # On v7x keep >= 2 grid steps so the "parallel" batch axis can shard
    # across the two TensorCores.
    min_steps = 2 if (is_v7 and B >= 2) else 1

    Bt, chunk_qkv, est = _pick_tiling(
        B, S, Hp,
        vmem_cap=vmem_cap,
        out_itemsize=jnp.dtype(out_dtype).itemsize,
        exp_bytes=jnp.dtype(exp_dtype).itemsize,
        min_steps=min_steps)

    # Always pass an explicit scoped-VMEM limit (the per-generation defaults —
    # 16 MiB on v5e — are smaller than physical VMEM), clamped to capacity.
    vmem_limit = int(min(max(est * 3 // 2, 32 << 20), vmem_cap - (1 << 20)))

    # --- Parameter prep ------------------------------------------------------
    def prep(w, b, s_=1.0):
        wt = (w.T * s_).astype(jnp.float32)                  # (H_in, H_out)
        wt = jnp.pad(wt, ((0, Hp - H), (0, Hp - H)))
        bb = jnp.pad((b * s_).astype(jnp.float32), (0, Hp - H))
        return wt, bb

    wq_t, bq_p = prep(wq, bq, 1.0 / scale)   # fold 1/sqrt(H) into the Q proj
    wk_t, bk_p = prep(wk, bk)
    wv_t, bv_p = prep(wv, bv)

    # Fused QKV weight (Hp, 3*Hp) in bf16 for the MXU; fused bias (1, 3*Hp) f32.
    w_qkv = jnp.concatenate([wq_t, wk_t, wv_t], axis=1).astype(jnp.bfloat16)
    b_qkv = jnp.concatenate([bq_p, bk_p, bv_p]).reshape(1, 3 * Hp)

    x_p = jnp.pad(x, ((0, 0), (0, 0), (0, Hp - H))).astype(jnp.bfloat16)

    kernel = functools.partial(_self_attention_kernel, bt=Bt, s=S, hp=Hp,
                               exp_dtype=exp_dtype, chunk_qkv=chunk_qkv)

    def _const_spec(shape):
        idx = lambda b: (0, 0)
        try:
            # Constant across the grid: single-buffer to save VMEM.
            return pl.BlockSpec(shape, idx, pipeline_mode=pl.Buffered(1))
        except Exception:  # pallas version without pipeline_mode / Buffered
            return pl.BlockSpec(shape, idx)

    out = pl.pallas_call(
        kernel,
        out_shape=jax.ShapeDtypeStruct((B, S, Hp), out_dtype),
        grid_spec=pltpu.PrefetchScalarGridSpec(
            num_scalar_prefetch=0,
            grid=(B // Bt,),
            in_specs=[
                pl.BlockSpec((Bt, S, Hp), lambda b: (b, 0, 0)),   # x
                _const_spec((Hp, 3 * Hp)),                        # fused W_qkv
                _const_spec((1, 3 * Hp)),                         # fused bias
            ],
            out_specs=pl.BlockSpec((Bt, S, Hp), lambda b: (b, 0, 0)),
        ),
        compiler_params=pltpu.CompilerParams(
            dimension_semantics=("parallel",),
            vmem_limit_bytes=vmem_limit),
    )(x_p, w_qkv, b_qkv)

    # TODO(synk): for very large S (>= ~1024 on v7x, ~2048 on v5e/v6e), switch
    # the score/softmax/AV stage to a KV-tiled online-softmax (flash-style)
    # loop — the full (S,S) f32 scores tile will not fit VMEM.
    # TODO(synk): the depad slice below is a separate full-activation HBM copy
    # when Hp > H; fuse it into the consumer (or keep the padded layout) when
    # this layer feeds another padded kernel.
    return out[:, :, :H]


def self_attention_ref(x, wq, bq, wk, bk, wv, bv):
    """Pure-JAX reference mirroring the PyTorch forward (mask=None)."""
    H = x.shape[-1]
    q = jnp.einsum("bsh,oh->bso", x, wq) + bq
    k = jnp.einsum("bsh,oh->bso", x, wk) + bk
    v = jnp.einsum("bsh,oh->bso", x, wv) + bv
    scores = jnp.einsum("bqh,bkh->bqk", q, k) / jnp.sqrt(jnp.float32(H))
    attn = jax.nn.softmax(scores, axis=-1)
    return jnp.einsum("bqk,bkh->bqh", attn, v)


if __name__ == "__main__":
    B, S, H = 2, 8, 32
    key = jax.random.PRNGKey(0)
    kx, kq, kbq, kk, kbk, kv, kbv = jax.random.split(key, 7)

    x = jax.random.normal(kx, (B, S, H), dtype=jnp.float32)
    # Deterministic parameter init (nn.Linear-style uniform bound 1/sqrt(H)).
    bound = 1.0 / math.sqrt(H)
    wq = jax.random.uniform(kq, (H, H), jnp.float32, -bound, bound)
    bq = jax.random.uniform(kbq, (H,), jnp.float32, -bound, bound)
    wk = jax.random.uniform(kk, (H, H), jnp.float32, -bound, bound)
    bk = jax.random.uniform(kbk, (H,), jnp.float32, -bound, bound)
    wv = jax.random.uniform(kv, (H, H), jnp.float32, -bound, bound)
    bv = jax.random.uniform(kbv, (H,), jnp.float32, -bound, bound)

    out = self_attention(x, wq, bq, wk, bk, wv, bv)
    out = jax.block_until_ready(out)

    ref = self_attention_ref(x, wq, bq, wk, bk, wv, bv)
    assert out.shape == (B, S, H)
    # bf16 MXU inputs + bf16 exp (v6e/v7x) + approx reciprocal -> loosened
    # tolerance vs f32 reference; fine for a GAN discriminator.
    assert jnp.allclose(out, ref, atol=2e-2, rtol=2e-2), "mismatch vs reference"

    # TODO(synk): optional `mask` argument (masked_fill with -1e9) not exercised
    # here; semantics with mask=None are reproduced exactly.
    print("KERNEL_OK")
</pallas_src>

<mosaic_0001>
module attributes {stable_mosaic.version = 11 : i64} {
  func.func @_self_attention_kernel(%arg0: i32, %arg1: memref<2x8x128xbf16, #tpu.memory_space<vmem>>, %arg2: memref<128x384xbf16, #tpu.memory_space<vmem>>, %arg3: memref<1x384xf32, #tpu.memory_space<vmem>>, %arg4: memref<2x8x128xf32, #tpu.memory_space<vmem>>) attributes {dimension_semantics = [#tpu.dimension_semantics<parallel>], iteration_bounds = array<i64: 1>, scalar_prefetch = 0 : i64, scratch_operands = 0 : i64, tpu.core_type = #tpu.core_type<tc>, window_params = [{transform_indices = @transform_0, window_bounds = array<i64: 2, 8, 128>}, {pipeline_mode = #tpu.pipeline_mode<synchronous>, transform_indices = @transform_1, window_bounds = array<i64: 128, 384>}, {pipeline_mode = #tpu.pipeline_mode<synchronous>, transform_indices = @transform_2, window_bounds = array<i64: 1, 384>}, {transform_indices = @transform_3, window_bounds = array<i64: 2, 8, 128>}]} {
    %c0 = arith.constant 0 : index
    %c0_0 = arith.constant 0 : index
    %c0_1 = arith.constant 0 : index
    %0 = vector.load %arg1[%c0, %c0_0, %c0_1] : memref<2x8x128xbf16, #tpu.memory_space<vmem>>, vector<2x8x128xbf16>
    %1 = vector.shape_cast %0 : vector<2x8x128xbf16> to vector<16x128xbf16>
    %c0_2 = arith.constant 0 : index
    %c0_3 = arith.constant 0 : index
    %2 = vector.load %arg2[%c0_2, %c0_3] : memref<128x384xbf16, #tpu.memory_space<vmem>>, vector<128x384xbf16>
    %cst = arith.constant dense<0.000000e+00> : vector<16x384xf32>
    %3 = tpu.matmul %1, %2, %cst {dimension_numbers = #tpu.dot_dimension_numbers<[1], [0], [0], [1], [0, 0, 1, 1], [], []>} : vector<16x128xbf16>, vector<128x384xbf16>, vector<16x384xf32> -> vector<16x384xf32>
    %c0_4 = arith.constant 0 : index
    %c0_5 = arith.constant 0 : index
    %4 = vector.load %arg3[%c0_4, %c0_5] : memref<1x384xf32, #tpu.memory_space<vmem>>, vector<1x384xf32>
    %5 = vector.broadcast %4 : vector<1x384xf32> to vector<16x384xf32>
    %6 = arith.addf %3, %5 : vector<16x384xf32>
    %7 = vector.extract_strided_slice %6 {offsets = [0, 0], sizes = [16, 128], strides = [1, 1]} : vector<16x384xf32> to vector<16x128xf32>
    %8 = arith.truncf %7 : vector<16x128xf32> to vector<16x128xbf16>
    %9 = vector.shape_cast %8 : vector<16x128xbf16> to vector<2x8x128xbf16>
    %10 = vector.extract_strided_slice %6 {offsets = [0, 128], sizes = [16, 128], strides = [1, 1]} : vector<16x384xf32> to vector<16x128xf32>
    %11 = arith.truncf %10 : vector<16x128xf32> to vector<16x128xbf16>
    %12 = vector.shape_cast %11 : vector<16x128xbf16> to vector<2x8x128xbf16>
    %13 = vector.extract_strided_slice %6 {offsets = [0, 256], sizes = [16, 128], strides = [1, 1]} : vector<16x384xf32> to vector<16x128xf32>
    %14 = arith.truncf %13 : vector<16x128xf32> to vector<16x128xbf16>
    %15 = vector.shape_cast %14 : vector<16x128xbf16> to vector<2x8x128xbf16>
    %cst_6 = arith.constant dense<0.000000e+00> : vector<2x8x8xf32>
    %16 = tpu.matmul %9, %12, %cst_6 {dimension_numbers = #tpu.dot_dimension_numbers<[2], [2], [1], [1], [0, 0, 0, 1, 1, 1], [0], [0]>} : vector<2x8x128xbf16>, vector<2x8x128xbf16>, vector<2x8x8xf32> -> vector<2x8x8xf32>
    %cst_7 = arith.constant dense<0xFF800000> : vector<2x8xf32>
    %17 = vector.multi_reduction <maximumf>, %16, %cst_7 [2] : vector<2x8x8xf32> to vector<2x8xf32>
    %18 = vector.shape_cast %17 : vector<2x8xf32> to vector<2x8x1xf32>
    %19 = vector.broadcast %18 : vector<2x8x1xf32> to vector<2x8x8xf32>
    %20 = arith.subf %16, %19 : vector<2x8x8xf32>
    %21 = arith.truncf %20 : vector<2x8x8xf32> to vector<2x8x8xbf16>
    %22 = math.exp %21 : vector<2x8x8xbf16>
    %23 = arith.extf %22 : vector<2x8x8xbf16> to vector<2x8x8xf32>
    %cst_8 = arith.constant dense<0.000000e+00> : vector<2x8xf32>
    %24 = vector.multi_reduction <add>, %23, %cst_8 [2] : vector<2x8x8xf32> to vector<2x8xf32>
    %25 = vector.shape_cast %24 : vector<2x8xf32> to vector<2x8x1xf32>
    %cst_9 = arith.constant dense<0.000000e+00> : vector<2x8x128xf32>
    %26 = tpu.matmul %22, %15, %cst_9 {dimension_numbers = #tpu.dot_dimension_numbers<[2], [1], [1], [2], [0, 0, 0, 1, 1, 2], [0], [0]>} : vector<2x8x8xbf16>, vector<2x8x128xbf16>, vector<2x8x128xf32> -> vector<2x8x128xf32>
    %27 = tpu.reciprocal %25 {approx = true} : vector<2x8x1xf32> -> vector<2x8x1xf32>
    %28 = vector.broadcast %27 : vector<2x8x1xf32> to vector<2x8x128xf32>
    %29 = arith.mulf %26, %28 : vector<2x8x128xf32>
    %c0_10 = arith.constant 0 : index
    %c0_11 = arith.constant 0 : index
    %c0_12 = arith.constant 0 : index
    %30 = vector.load %arg4[%c0_10, %c0_11, %c0_12] : memref<2x8x128xf32, #tpu.memory_space<vmem>>, vector<2x8x128xf32>
    tpu.vector_store %arg4[%c0_10, %c0_11, %c0_12], %29 {strides = array<i32>} : memref<2x8x128xf32, #tpu.memory_space<vmem>>, vector<2x8x128xf32>,
    return
  }
  func.func @transform_0(%arg0: i32) -> (i32, i32, i32) {
    %c0_i32 = arith.constant 0 : i32
    %c0_i32_0 = arith.constant 0 : i32
    %c0_i32_1 = arith.constant 0 : i32
    return %arg0, %c0_i32, %c0_i32_0 : i32, i32, i32
  }
  func.func @transform_1(%arg0: i32) -> (i32, i32) {
    %c0_i32 = arith.constant 0 : i32
    %c0_i32_0 = arith.constant 0 : i32
    %c0_i32_1 = arith.constant 0 : i32
    return %c0_i32, %c0_i32_0 : i32, i32
  }
  func.func @transform_2(%arg0: i32) -> (i32, i32) {
    %c0_i32 = arith.constant 0 : i32
    %c0_i32_0 = arith.constant 0 : i32
    %c0_i32_1 = arith.constant 0 : i32
    return %c0_i32, %c0_i32_0 : i32, i32
  }
  func.func @transform_3(%arg0: i32) -> (i32, i32, i32) {
    %c0_i32 = arith.constant 0 : i32
    %c0_i32_0 = arith.constant 0 : i32
    %c0_i32_1 = arith.constant 0 : i32
    return %arg0, %c0_i32, %c0_i32_0 : i32, i32, i32
  }
}

</mosaic_0001>

<llo_original>
// kernel: tpu_custom_call.1
$region0: #{tpu_custom_call.1}
  #allocation0 [shape = 'u32[]', space=smem, size = 0x4, offset = 0x4, fixed_abs, tag = 'smem constant byte address 0x4 - core index']
  #allocation1 [shape = 'u32[144,128]{1,0:T(1,128)}', space=vmem, size = 0x12000, scoped, tag = 'internal scratch']
  %s0 = inlined_call_operand.hbm [shape: bf16[2,8,128], index: 0, kind: input, shape index: {}]
  %s1 = inlined_call_operand.hbm [shape: bf16[128,384], index: 1, kind: input, shape index: {}]
  %s2 = inlined_call_operand.vmem [shape: f32[1,384], index: 2, kind: input, shape index: {}]
  %s3 = inlined_call_operand.hbm [shape: f32[2,8,128], index: 3, kind: output, shape index: {}]
  %s4 = sld [smem:[#allocation0]]
  $region30: #{tpu_custom_call.1} parent=0
    _
  %s6 = ssub.s32 1, %s4
  %s7 = scalar_select 0, %s6, %s4
  $region1: #{tpu_custom_call.1} parent=0
    #allocation2 [shape = 'u8[4096]{0}', space=vmem, size = 0x1000, scoped, tag = 'input window, operand 0, single buffered']
    #allocation3 [shape = 's32[1]{0}', space=sflag, size = 0x4, scoped, tag = 'scoped memory for tpu_custom_call.1']
    #allocation4 [shape = 's32[1]{0}', space=sflag, size = 0x4, scoped, tag = 'scoped memory for tpu_custom_call.1']
    #allocation5 [shape = 'u8[98304]{0}', space=vmem, size = 0x18000, scoped, tag = 'input window, operand 1, single buffered']
    #allocation6 [shape = 's32[1]{0}', space=sflag, size = 0x4, scoped, tag = 'scoped memory for tpu_custom_call.1']
    #allocation7 [shape = 'u8[8192]{0}', space=vmem, size = 0x2000, scoped, tag = 'output window, operand 0, single buffered']
    %8 = vsyncpa [#allocation3], 0
    %9 = vsyncpa [#allocation6], 0
    %10 = vsyncpa [#allocation4], 0
    // Predicated region
    $region2: #{tpu_custom_call.1} parent=1 // pred_check
      _
    $region3: #{tpu_custom_call.1} parent=1 // pred_check_branch
      %12 = sbr.rel (0) target = $region5
    $region4: #{tpu_custom_call.1} parent=1 // pred_region
      %s14 = ssub.s32 128, 128
      %15 = vsyncadd [#allocation3], %s14
      %s16 = sshll.u32 [#allocation2], 4
      %s17 = int_to_ptr.vmem [resolvable:$true] %s16
      %22 = dma.hbm_to_vmem [thread:$0]  %s0, 128, %s17, [#allocation3], 64, 64, 4
    $region5: #{tpu_custom_call.1} parent=1 // pred_fallthru
      _
    // Predicated region
    $region6: #{tpu_custom_call.1} parent=1 // pred_check
      _
    $region7: #{tpu_custom_call.1} parent=1 // pred_check_branch
      %24 = sbr.rel (0) target = $region9
    $region8: #{tpu_custom_call.1} parent=1 // pred_region
      %s26 = ssub.s32 3072, 3072
      %27 = vsyncadd [#allocation6], %s26
      %s28 = sshll.u32 [#allocation5], 4
      %s29 = int_to_ptr.vmem [resolvable:$true] %s28
      %34 = dma.hbm_to_vmem [thread:$0]  %s1, 3072, %s29, [#allocation6], 192, 192, 12
    $region9: #{tpu_custom_call.1} parent=1 // pred_fallthru
      _
    // Predicated region
    $region10: #{tpu_custom_call.1} parent=1 // pred_check
      _
    $region11: #{tpu_custom_call.1} parent=1 // pred_check_branch
      %36 = sbr.rel (0) target = $region13
    $region12: #{tpu_custom_call.1} parent=1 // pred_region
      _
    $region13: #{tpu_custom_call.1} parent=1 // pred_fallthru
      _
    // Predicated region
    $region14: #{tpu_custom_call.1} parent=1 // pred_check
      _
    $region15: #{tpu_custom_call.1} parent=1 // pred_check_branch
      %38 = sbr.rel (0) target = $region17
    $region16: #{tpu_custom_call.1} parent=1 // pred_region
      %39 = dma.done [#allocation3], 128
    $region17: #{tpu_custom_call.1} parent=1 // pred_fallthru
      _
    // Predicated region
    $region18: #{tpu_custom_call.1} parent=1 // pred_check
      _
    $region19: #{tpu_custom_call.1} parent=1 // pred_check_branch
      %41 = sbr.rel (0) target = $region21
    $region20: #{tpu_custom_call.1} parent=1 // pred_region
      %42 = dma.done [#allocation6], 3072
    $region21: #{tpu_custom_call.1} parent=1 // pred_fallthru
      _
    %v44 = vld [vmem:[#allocation2] sm:$0xf]
    %v45 = vld [vmem:[#allocation2 + $0x4] sm:$0xf]
    %v46 = vld [vmem:[#allocation5] sm:$0xff]
    %v47 = vld [vmem:[#allocation5 + $0x8] sm:$0xf]
    %v48 = vld [vmem:[#allocation5 + $0xc] sm:$0xff]
    %v49 = vld [vmem:[#allocation5 + $0x14] sm:$0xf]
    %v50 = vld [vmem:[#allocation5 + $0x18] sm:$0xff]
    %v51 = vld [vmem:[#allocation5 + $0x20] sm:$0xf]
    %v52 = vld [vmem:[#allocation5 + $0x24] sm:$0xff]
    %v53 = vld [vmem:[#allocation5 + $0x2c] sm:$0xf]
    %v54 = vld [vmem:[#allocation5 + $0x30] sm:$0xff]
    %v55 = vld [vmem:[#allocation5 + $0x38] sm:$0xf]
    %v56 = vld [vmem:[#allocation5 + $0x3c] sm:$0xff]
    %v57 = vld [vmem:[#allocation5 + $0x44] sm:$0xf]
    %v58 = vld [vmem:[#allocation5 + $0x48] sm:$0xff]
    %v59 = vld [vmem:[#allocation5 + $0x50] sm:$0xf]
    %v60 = vld [vmem:[#allocation5 + $0x54] sm:$0xff]
    %v61 = vld [vmem:[#allocation5 + $0x5c] sm:$0xf]
    %v62 = vld [vmem:[#allocation5 + $0x60] sm:$0xff]
    %v63 = vld [vmem:[#allocation5 + $0x68] sm:$0xf]
    %v64 = vld [vmem:[#allocation5 + $0x6c] sm:$0xff]
    %v65 = vld [vmem:[#allocation5 + $0x74] sm:$0xf]
    %v66 = vld [vmem:[#allocation5 + $0x78] sm:$0xff]
    %v67 = vld [vmem:[#allocation5 + $0x80] sm:$0xf]
    %v68 = vld [vmem:[#allocation5 + $0x84] sm:$0xff]
    %v69 = vld [vmem:[#allocation5 + $0x8c] sm:$0xf]
    %v70 = vld [vmem:[#allocation5 + $0x90] sm:$0xff]
    %v71 = vld [vmem:[#allocation5 + $0x98] sm:$0xf]
    %v72 = vld [vmem:[#allocation5 + $0x9c] sm:$0xff]
    %v73 = vld [vmem:[#allocation5 + $0xa4] sm:$0xf]
    %v74 = vld [vmem:[#allocation5 + $0xa8] sm:$0xff]
    %v75 = vld [vmem:[#allocation5 + $0xb0] sm:$0xf]
    %v76 = vld [vmem:[#allocation5 + $0xb4] sm:$0xff]
    %v77 = vld [vmem:[#allocation5 + $0xbc] sm:$0xf]
    %v78 = vld [vmem:[%s2] sm:$0x7]
    %v80 = vlaneseq
    %v81 = vshrl.u32 %v80, 7
    %v82 = vsub.s32 0, %v81
    %v83 = vrot.slane %v78, %v82
    %v84 = vlaneseq
    %v85 = vshrl.u32 %v84, 7
    %v86 = vsub.s32 1, %v85
    %v87 = vrot.slane %v78, %v86
    %v88 = vlaneseq
    %v89 = vshrl.u32 %v88, 7
    %v90 = vsub.s32 2, %v89
    %v91 = vrot.slane %v78, %v90
    %v97 = vunpack.c.l.b16 %v44
    %v98 = vunpack.c.l.b16 %v45
    %v99 = vpack.c.b16 %v98, %v97
    %v133 = vunpack.c.l.b16 %v46
    %v134 = vunpack.c.h.b16 %v46
    %v135 = vunpack.c.l.b16 %v47
    %v136 = vunpack.c.l.b16 %v48
    %v137 = vunpack.c.h.b16 %v48
    %v138 = vunpack.c.l.b16 %v49
    %v139 = vunpack.c.l.b16 %v50
    %v140 = vunpack.c.h.b16 %v50
    %v141 = vunpack.c.l.b16 %v51
    %v142 = vunpack.c.l.b16 %v52
    %v143 = vunpack.c.h.b16 %v52
    %v144 = vunpack.c.l.b16 %v53
    %v145 = vunpack.c.l.b16 %v54
    %v146 = vunpack.c.h.b16 %v54
    %v147 = vunpack.c.l.b16 %v55
    %v148 = vunpack.c.l.b16 %v56
    %v149 = vunpack.c.h.b16 %v56
    %v150 = vunpack.c.l.b16 %v57
    %v151 = vunpack.c.l.b16 %v58
    %v152 = vunpack.c.h.b16 %v58
    %v153 = vunpack.c.l.b16 %v59
    %v154 = vunpack.c.l.b16 %v60
    %v155 = vunpack.c.h.b16 %v60
    %v156 = vunpack.c.l.b16 %v61
    %v157 = vunpack.c.l.b16 %v62
    %v158 = vunpack.c.h.b16 %v62
    %v159 = vunpack.c.l.b16 %v63
    %v160 = vunpack.c.l.b16 %v64
    %v161 = vunpack.c.h.b16 %v64
    %v162 = vunpack.c.l.b16 %v65
    %v163 = vunpack.c.l.b16 %v66
    %v164 = vunpack.c.h.b16 %v66
    %v165 = vunpack.c.l.b16 %v67
    %v166 = vunpack.c.l.b16 %v68
    %v167 = vunpack.c.h.b16 %v68
    %v168 = vunpack.c.l.b16 %v69
    %v169 = vunpack.c.l.b16 %v70
    %v170 = vunpack.c.h.b16 %v70
    %v171 = vunpack.c.l.b16 %v71
    %v172 = vunpack.c.l.b16 %v72
    %v173 = vunpack.c.h.b16 %v72
    %v174 = vunpack.c.l.b16 %v73
    %v175 = vunpack.c.l.b16 %v74
    %v176 = vunpack.c.h.b16 %v74
    %v177 = vunpack.c.l.b16 %v75
    %v178 = vunpack.c.l.b16 %v76
    %v179 = vunpack.c.h.b16 %v76
    %v180 = vunpack.c.l.b16 %v77
    %v181 = vpack.c.b16 %v136, %v133
    %v182 = vpack.c.b16 %v137, %v134
    %v183 = vpack.c.b16 %v138, %v135
    %v184 = vpack.c.b16 %v142, %v139
    %v185 = vpack.c.b16 %v143, %v140
    %v186 = vpack.c.b16 %v144, %v141
    %v187 = vpack.c.b16 %v148, %v145
    %v188 = vpack.c.b16 %v149, %v146
    %v189 = vpack.c.b16 %v150, %v147
    %v190 = vpack.c.b16 %v154, %v151
    %v191 = vpack.c.b16 %v155, %v152
    %v192 = vpack.c.b16 %v156, %v153
    %v193 = vpack.c.b16 %v160, %v157
    %v194 = vpack.c.b16 %v161, %v158
    %v195 = vpack.c.b16 %v162, %v159
    %v196 = vpack.c.b16 %v166, %v163
    %v197 = vpack.c.b16 %v167, %v164
    %v198 = vpack.c.b16 %v168, %v165
    %v199 = vpack.c.b16 %v172, %v169
    %v200 = vpack.c.b16 %v173, %v170
    %v201 = vpack.c.b16 %v174, %v171
    %v202 = vpack.c.b16 %v178, %v175
    %v203 = vpack.c.b16 %v179, %v176
    %v204 = vpack.c.b16 %v180, %v177
    %229 = vmatprep.subr.bf16.mxu0 %v182
    %230 = vmatpush1.bf16.msra.mxu0 %v181
    %231 = vmatprep.subr.bf16.mxu0 %v185
    %232 = vmatpush1.bf16.msra.mxu0 %v184
    %233 = vmatprep.subr.bf16.mxu0 %v188
    %234 = vmatpush1.bf16.msra.mxu0 %v187
    %235 = vmatprep.subr.bf16.mxu0 %v191
    %236 = vmatpush1.bf16.msra.mxu0 %v190
    %237 = vmatprep.subr.bf16.mxu0 %v194
    %238 = vmatpush1.bf16.msra.mxu0 %v193
    %239 = vmatprep.subr.bf16.mxu0 %v197
    %240 = vmatpush1.bf16.msra.mxu0 %v196
    %241 = vmatprep.subr.bf16.mxu0 %v200
    %242 = vmatpush1.bf16.msra.mxu0 %v199
    %243 = vmatprep.subr.bf16.mxu0 %v203
    %244 = vmatpush1.bf16.msra.mxu0 %v202
    %245 = vmatprep.subr.bf16.mxu0 0
    %246 = vmatpush1.bf16.msra.mxu0 0
    %247 = vmatprep.subr.bf16.mxu0 0
    %248 = vmatpush1.bf16.msra.mxu0 0
    %249 = vmatprep.subr.bf16.mxu0 0
    %250 = vmatpush1.bf16.msra.mxu0 0
    %251 = vmatprep.subr.bf16.mxu0 0
    %252 = vmatpush1.bf16.msra.mxu0 0
    %253 = vmatprep.subr.bf16.mxu0 0
    %254 = vmatpush1.bf16.msra.mxu0 0
    %255 = vmatprep.subr.bf16.mxu0 0
    %256 = vmatpush1.bf16.msra.mxu0 0
    %257 = vmatprep.subr.bf16.mxu0 0
    %258 = vmatpush1.bf16.msra.mxu0 0
    %259 = vmatprep.subr.bf16.mxu0 0
    %260 = vmatpush1.bf16.msra.mxu0 0
    %261 = vmatprep.mubr.bf16.mxu0 0
    %262 = vmatmul.mubr.bf16.gmra.mrb[0].mxu0 %v99
    %v263 = vpop.f32.mrb[0].mxu0
    %v264 = vadd.f32 %v83, %v263
    %v265 = vpop.f32.mrb[0].mxu0
    %v266 = vadd.f32 %v87, %v265
    %v267 = vpop.f32.mrb[0].mxu0
    %v268 = vadd.f32 %v83, %v267
    %v269 = vpop.f32.mrb[0].mxu0
    %v270 = vadd.f32 %v87, %v269
    %271 = vdwg.mxu0
    %272 = vmatprep.subr.bf16.mxu0 0
    %273 = vmatpush1.bf16.msra.mxu0 %v183
    %274 = vmatprep.subr.bf16.mxu0 0
    %275 = vmatpush1.bf16.msra.mxu0 %v186
    %276 = vmatprep.subr.bf16.mxu0 0
    %277 = vmatpush1.bf16.msra.mxu0 %v189
    %278 = vmatprep.subr.bf16.mxu0 0
    %279 = vmatpush1.bf16.msra.mxu0 %v192
    %280 = vmatprep.subr.bf16.mxu0 0
    %281 = vmatpush1.bf16.msra.mxu0 %v195
    %282 = vmatprep.subr.bf16.mxu0 0
    %283 = vmatpush1.bf16.msra.mxu0 %v198
    %284 = vmatprep.subr.bf16.mxu0 0
    %285 = vmatpush1.bf16.msra.mxu0 %v201
    %286 = vmatprep.subr.bf16.mxu0 0
    %287 = vmatpush1.bf16.msra.mxu0 %v204
    %288 = vmatprep.subr.bf16.mxu0 0
    %289 = vmatpush1.bf16.msra.mxu0 0
    %290 = vmatprep.subr.bf16.mxu0 0
    %291 = vmatpush1.bf16.msra.mxu0 0
    %292 = vmatprep.subr.bf16.mxu0 0
    %293 = vmatpush1.bf16.msra.mxu0 0
    %294 = vmatprep.subr.bf16.mxu0 0
    %295 = vmatpush1.bf16.msra.mxu0 0
    %296 = vmatprep.subr.bf16.mxu0 0
    %297 = vmatpush1.bf16.msra.mxu0 0
    %298 = vmatprep.subr.bf16.mxu0 0
    %299 = vmatpush1.bf16.msra.mxu0 0
    %300 = vmatprep.subr.bf16.mxu0 0
    %301 = vmatpush1.bf16.msra.mxu0 0
    %302 = vmatprep.subr.bf16.mxu0 0
    %303 = vmatpush1.bf16.msra.mxu0 0
    %304 = vmatprep.mubr.bf16.mxu0 0
    %305 = vmatmul.mubr.bf16.gmra.mrb[0].mxu0 %v99
    %v306 = vpop.f32.mrb[0].mxu0
    %v307 = vadd.f32 %v91, %v306
    %v308 = vpop.f32.mrb[0].mxu0
    %v309 = vpop.f32.mrb[0].mxu0
    %v310 = vadd.f32 %v91, %v309
    %v311 = vpop.f32.mrb[0].mxu0
    %312 = vdwg.mxu0
    %v313 = vpack.c.bf16 %v268, %v264
    %v315 = vunpack.c.l.b16 %v313
    %v316 = vunpack.c.h.b16 %v313
    %v317 = vpack.c.b16 %v315, %v315
    %v318 = vpack.c.b16 %v316, %v316
    %v321 = vpack.c.bf16 %v270, %v266
    %v323 = vunpack.c.l.b16 %v321
    %v324 = vunpack.c.h.b16 %v321
    %v325 = vpack.c.b16 %v323, %v323
    %v326 = vpack.c.b16 %v324, %v324
    %v329 = vpack.c.bf16 %v310, %v307
    %v331 = vunpack.c.l.b16 %v329
    %v332 = vunpack.c.h.b16 %v329
    %v333 = vpack.c.b16 %v331, %v331
    %v334 = vpack.c.b16 %v332, %v332
    %335 = vmatprep.subr.bf16.mxu0 0
    %336 = vmatpush1.bf16.xpose.msra.mxu0 %v325
    %337 = vmatprep.subr.bf16.mxu0 0
    %338 = vmatpush1.bf16.xpose.msra.mxu0 0
    %339 = vmatprep.subr.bf16.mxu0 0
    %340 = vmatpush1.bf16.xpose.msra.mxu0 0
    %341 = vmatprep.subr.bf16.mxu0 0
    %342 = vmatpush1.bf16.xpose.msra.mxu0 0
    %343 = vmatprep.subr.bf16.mxu0 0
    %344 = vmatpush1.bf16.xpose.msra.mxu0 0
    %345 = vmatprep.subr.bf16.mxu0 0
    %346 = vmatpush1.bf16.xpose.msra.mxu0 0
    %347 = vmatprep.subr.bf16.mxu0 0
    %348 = vmatpush1.bf16.xpose.msra.mxu0 0
    %349 = vmatprep.subr.bf16.mxu0 0
    %350 = vmatpush1.bf16.xpose.msra.mxu0 0
    %351 = vmatprep.subr.bf16.mxu0 0
    %352 = vmatpush1.bf16.xpose.msra.mxu0 0
    %353 = vmatprep.subr.bf16.mxu0 0
    %354 = vmatpush1.bf16.xpose.msra.mxu0 0
    %355 = vmatprep.subr.bf16.mxu0 0
    %356 = vmatpush1.bf16.xpose.msra.mxu0 0
    %357 = vmatprep.subr.bf16.mxu0 0
    %358 = vmatpush1.bf16.xpose.msra.mxu0 0
    %359 = vmatprep.subr.bf16.mxu0 0
    %360 = vmatpush1.bf16.xpose.msra.mxu0 0
    %361 = vmatprep.subr.bf16.mxu0 0
    %362 = vmatpush1.bf16.xpose.msra.mxu0 0
    %363 = vmatprep.subr.bf16.mxu0 0
    %364 = vmatpush1.bf16.xpose.msra.mxu0 0
    %365 = vmatprep.subr.bf16.mxu0 0
    %366 = vmatpush1.bf16.xpose.msra.mxu0 0
    %367 = vmatprep.mubr.bf16.mxu0 0
    %368 = vmatmul.mubr.bf16.gmra.mrb[0].mxu0 %v317
    %v369 = vpop.f32.mrb[0].mxu0
    %v370 = vadd.f32 0.0, %v369
    %v371 = vpop.f32.mrb[0].mxu0
    %v372 = vpop.f32.mrb[0].mxu0
    %v373 = vpop.f32.mrb[0].mxu0
    %374 = vdwg.mxu0
    %375 = vmatprep.subr.bf16.mxu0 0
    %376 = vmatpush1.bf16.xpose.msra.mxu0 %v326
    %377 = vmatprep.subr.bf16.mxu0 0
    %378 = vmatpush1.bf16.xpose.msra.mxu0 0
    %379 = vmatprep.subr.bf16.mxu0 0
    %380 = vmatpush1.bf16.xpose.msra.mxu0 0
    %381 = vmatprep.subr.bf16.mxu0 0
    %382 = vmatpush1.bf16.xpose.msra.mxu0 0
    %383 = vmatprep.subr.bf16.mxu0 0
    %384 = vmatpush1.bf16.xpose.msra.mxu0 0
    %385 = vmatprep.subr.bf16.mxu0 0
    %386 = vmatpush1.bf16.xpose.msra.mxu0 0
    %387 = vmatprep.subr.bf16.mxu0 0
    %388 = vmatpush1.bf16.xpose.msra.mxu0 0
    %389 = vmatprep.subr.bf16.mxu0 0
    %390 = vmatpush1.bf16.xpose.msra.mxu0 0
    %391 = vmatprep.subr.bf16.mxu0 0
    %392 = vmatpush1.bf16.xpose.msra.mxu0 0
    %393 = vmatprep.subr.bf16.mxu0 0
    %394 = vmatpush1.bf16.xpose.msra.mxu0 0
    %395 = vmatprep.subr.bf16.mxu0 0
    %396 = vmatpush1.bf16.xpose.msra.mxu0 0
    %397 = vmatprep.subr.bf16.mxu0 0
    %398 = vmatpush1.bf16.xpose.msra.mxu0 0
    %399 = vmatprep.subr.bf16.mxu0 0
    %400 = vmatpush1.bf16.xpose.msra.mxu0 0
    %401 = vmatprep.subr.bf16.mxu0 0
    %402 = vmatpush1.bf16.xpose.msra.mxu0 0
    %403 = vmatprep.subr.bf16.mxu0 0
    %404 = vmatpush1.bf16.xpose.msra.mxu0 0
    %405 = vmatprep.subr.bf16.mxu0 0
    %406 = vmatpush1.bf16.xpose.msra.mxu0 0
    %407 = vmatprep.mubr.bf16.mxu0 0
    %408 = vmatmul.mubr.bf16.gmra.mrb[0].mxu0 %v318
    %v409 = vpop.f32.mrb[0].mxu0
    %v410 = vadd.f32 0.0, %v409
    %v411 = vpop.f32.mrb[0].mxu0
    %v412 = vpop.f32.mrb[0].mxu0
    %v413 = vpop.f32.mrb[0].mxu0
    %414 = vdwg.mxu0
    %vm415 = vcmask 64512
    %v416 = vsel %vm415, %v370, -inf
    %417 = vmax.xlane.f32.xlu0 %v416
    %v418 = vpop.xlane.xlu0 %417
    %v419 = vsel %vm415, %v410, -inf
    %420 = vmax.xlane.f32.xlu0 %v419
    %v421 = vpop.xlane.xlu0 %420
    %v422 = vsub.f32 %v370, %v418
    %v423 = vsub.f32 %v410, %v421
    %v424 = vpack.c.bf16 %v422, %v422
    %v425 = vpack.c.bf16 %v423, %v423
    %v427 = vmul.bf16 %v424, 1069105081
    %v428 = vpow.bf16.pop %v427
    %v430 = vmul.bf16 %v425, 1069105081
    %v431 = vpow.bf16.pop %v430
    %v432 = vunpack.c.l.bf16 %v428
    %v433 = vunpack.c.l.bf16 %v431
    %v434 = vsel %vm415, %v432, 0.0
    %435 = vadd.xlane.f32.xlu0 %v434
    %v436 = vpop.xlane.xlu0 %435
    %v437 = vsel %vm415, %v433, 0.0
    %438 = vadd.xlane.f32.xlu0 %v437
    %v439 = vpop.xlane.xlu0 %438
    %v441 = vsel %vm415, %v428, 0
    %vm443 = vcmask 1043456
    %v445 = vsel %vm443, %v333, 0
    %447 = vmatprep.subr.bf16.mxu0 0
    %448 = vmatpush1.bf16.msra.mxu0 %v445
    %449 = vmatprep.subr.bf16.mxu0 0
    %450 = vmatpush1.bf16.msra.mxu0 0
    %451 = vmatprep.subr.bf16.mxu0 0
    %452 = vmatpush1.bf16.msra.mxu0 0
    %453 = vmatprep.subr.bf16.mxu0 0
    %454 = vmatpush1.bf16.msra.mxu0 0
    %455 = vmatprep.subr.bf16.mxu0 0
    %456 = vmatpush1.bf16.msra.mxu0 0
    %457 = vmatprep.subr.bf16.mxu0 0
    %458 = vmatpush1.bf16.msra.mxu0 0
    %459 = vmatprep.subr.bf16.mxu0 0
    %460 = vmatpush1.bf16.msra.mxu0 0
    %461 = vmatprep.subr.bf16.mxu0 0
    %462 = vmatpush1.bf16.msra.mxu0 0
    %463 = vmatprep.subr.bf16.mxu0 0
    %464 = vmatpush1.bf16.msra.mxu0 0
    %465 = vmatprep.subr.bf16.mxu0 0
    %466 = vmatpush1.bf16.msra.mxu0 0
    %467 = vmatprep.subr.bf16.mxu0 0
    %468 = vmatpush1.bf16.msra.mxu0 0
    %469 = vmatprep.subr.bf16.mxu0 0
    %470 = vmatpush1.bf16.msra.mxu0 0
    %471 = vmatprep.subr.bf16.mxu0 0
    %472 = vmatpush1.bf16.msra.mxu0 0
    %473 = vmatprep.subr.bf16.mxu0 0
    %474 = vmatpush1.bf16.msra.mxu0 0
    %475 = vmatprep.subr.bf16.mxu0 0
    %476 = vmatpush1.bf16.msra.mxu0 0
    %477 = vmatprep.subr.bf16.mxu0 0
    %478 = vmatpush1.bf16.msra.mxu0 0
    %479 = vmatprep.mubr.bf16.mxu0 0
    %480 = vmatmul.mubr.bf16.gmra.mrb[0].mxu0 %v441
    %v481 = vpop.f32.mrb[0].mxu0
    %v482 = vadd.f32 0.0, %v481
    %v483 = vpop.f32.mrb[0].mxu0
    %v484 = vpop.f32.mrb[0].mxu0
    %v485 = vpop.f32.mrb[0].mxu0
    %486 = vdwg.mxu0
    %v488 = vsel %vm415, %v431, 0
    %v491 = vsel %vm443, %v334, 0
    %493 = vmatprep.subr.bf16.mxu0 0
    %494 = vmatpush1.bf16.msra.mxu0 %v491
    %495 = vmatprep.subr.bf16.mxu0 0
    %496 = vmatpush1.bf16.msra.mxu0 0
    %497 = vmatprep.subr.bf16.mxu0 0
    %498 = vmatpush1.bf16.msra.mxu0 0
    %499 = vmatprep.subr.bf16.mxu0 0
    %500 = vmatpush1.bf16.msra.mxu0 0
    %501 = vmatprep.subr.bf16.mxu0 0
    %502 = vmatpush1.bf16.msra.mxu0 0
    %503 = vmatprep.subr.bf16.mxu0 0
    %504 = vmatpush1.bf16.msra.mxu0 0
    %505 = vmatprep.subr.bf16.mxu0 0
    %506 = vmatpush1.bf16.msra.mxu0 0
    %507 = vmatprep.subr.bf16.mxu0 0
    %508 = vmatpush1.bf16.msra.mxu0 0
    %509 = vmatprep.subr.bf16.mxu0 0
    %510 = vmatpush1.bf16.msra.mxu0 0
    %511 = vmatprep.subr.bf16.mxu0 0
    %512 = vmatpush1.bf16.msra.mxu0 0
    %513 = vmatprep.subr.bf16.mxu0 0
    %514 = vmatpush1.bf16.msra.mxu0 0
    %515 = vmatprep.subr.bf16.mxu0 0
    %516 = vmatpush1.bf16.msra.mxu0 0
    %517 = vmatprep.subr.bf16.mxu0 0
    %518 = vmatpush1.bf16.msra.mxu0 0
    %519 = vmatprep.subr.bf16.mxu0 0
    %520 = vmatpush1.bf16.msra.mxu0 0
    %521 = vmatprep.subr.bf16.mxu0 0
    %522 = vmatpush1.bf16.msra.mxu0 0
    %523 = vmatprep.subr.bf16.mxu0 0
    %524 = vmatpush1.bf16.msra.mxu0 0
    %525 = vmatprep.mubr.bf16.mxu0 0
    %526 = vmatmul.mubr.bf16.gmra.mrb[0].mxu0 %v488
    %v527 = vpop.f32.mrb[0].mxu0
    %v528 = vadd.f32 0.0, %v527
    %v529 = vpop.f32.mrb[0].mxu0
    %v530 = vpop.f32.mrb[0].mxu0
    %v531 = vpop.f32.mrb[0].mxu0
    %532 = vdwg.mxu0
    %v533 = vrcp.pop %v436
    %v534 = vrcp.pop %v439
    %v535 = vmul.f32 %v482, %v533
    %v536 = vmul.f32 %v528, %v534
    %537 = vst [vmem:[#allocation7] sm:$0xff] %v535
    %538 = vst [vmem:[#allocation7 + $0x8] sm:$0xff] %v536
    // Predicated region
    $region22: #{tpu_custom_call.1} parent=1 // pred_check
      _
    $region23: #{tpu_custom_call.1} parent=1 // pred_check_branch
      %540 = sbr.rel (0) target = $region25
    $region24: #{tpu_custom_call.1} parent=1 // pred_region
      %s542 = ssub.s32 256, 256
      %543 = vsyncadd [#allocation4], %s542
      %s544 = sshll.u32 [#allocation7], 4
      %s545 = int_to_ptr.vmem [resolvable:$true] %s544
      %550 = dma.vmem_to_hbm [thread:$0]  %s545, 256, %s3, [#allocation4], 128, 128, 8
    $region25: #{tpu_custom_call.1} parent=1 // pred_fallthru
      _
    // Predicated region
    $region26: #{tpu_custom_call.1} parent=1 // pred_check
      _
    $region27: #{tpu_custom_call.1} parent=1 // pred_check_branch
      %552 = sbr.rel (0) target = $region29
    $region28: #{tpu_custom_call.1} parent=1 // pred_region
      %553 = dma.done [#allocation4], 256
    $region29: #{tpu_custom_call.1} parent=1 // pred_fallthru
      _
    %554 = vsyncpa [#allocation3], 1
    %555 = vsyncpa [#allocation6], 1
    %556 = vsyncpa [#allocation4], 1

</llo_original>
